<compile_context>
chip_gen: v6e
topology: v6e:2x2x1
jax: 0.10.0
libtpu: 0.0.40
codegen_flags: <defaults>
</compile_context>

<pallas_src>
import jax
import jax.numpy as jnp
from jax.experimental import pallas as pl
from jax.experimental.pallas import tpu as pltpu


def _mean_pool_kernel(mask_ref, hidden_ref, out_ref, acc_ref, len_ref):
    # mask_ref:   (tb, ts)      VMEM
    # hidden_ref: (tb, ts, th)  VMEM (native dtype)
    # out_ref:    (tb, th)      VMEM
    # acc_ref:    (tb, th) f32  scratch (persists across the S grid axis)
    # len_ref:    (tb, 1)  f32  scratch
    s_step = pl.program_id(2)

    @pl.when(s_step == 0)
    def _init():
        acc_ref[...] = jnp.zeros_like(acc_ref)
        len_ref[...] = jnp.zeros_like(len_ref)

    hidden = hidden_ref[...]                       # (tb, ts, th), native dtype
    mask = mask_ref[...]                           # (tb, ts)

    # Masked sum over this sequence tile.  Multiply in the hidden dtype (the
    # mask is exactly 0/1, so no precision is lost) and accumulate in f32 —
    # avoids materializing a full f32 copy of the hidden tile.
    masked = mask.astype(hidden.dtype)[:, :, None] * hidden
    acc_ref[...] += jnp.sum(masked, axis=1, dtype=jnp.float32)
    len_ref[...] += jnp.sum(mask.astype(jnp.float32), axis=1, keepdims=True)

    @pl.when(s_step == pl.num_programs(2) - 1)
    def _finalize():
        # Reciprocal on the EUP (free slot), multiply on the VPU, all in f32,
        # cast only at the very end.
        inv_len = pl.reciprocal(len_ref[...] + jnp.float32(1e-5), approx=True)
        out_ref[...] = (acc_ref[...] * inv_len).astype(out_ref.dtype)


def _divisor_tile(dim, max_tile, align):
    """Largest multiple of `align` dividing `dim`, <= max_tile.

    If `dim` is not a multiple of `align`, fall back to the full dimension
    (a block equal to the full array dim is always layout-legal)."""
    if dim % align != 0:
        return dim
    best = align
    t = align
    limit = min(dim, max_tile)
    while t <= limit:
        if dim % t == 0:
            best = t
        t += align
    return best


def _pick_tiles(B, S, H, dtype, tile_budget_bytes=4 * 1024 * 1024):
    itemsize = jnp.dtype(dtype).itemsize
    # Batch tile: 8 rows (sublane multiple) when the batch divides evenly.
    tb = 8 if (B >= 8 and B % 8 == 0) else B
    # Hidden tile: lane-dense (multiple of 128) up to 512, else full H.
    th = _divisor_tile(H, 512, 128)
    # Sequence tile: multiple of 128 (it is the mask's lane dim), sized so the
    # hidden tile stays within ~4 MiB -> safe to double-buffer on all chips.
    ts_max = max(128, tile_budget_bytes // max(1, tb * th * itemsize))
    ts = _divisor_tile(S, ts_max, 128)
    return tb, ts, th


def mean_pooling(hidden_state: jax.Array, attention_mask: jax.Array) -> jax.Array:
    """Masked mean pooling over the sequence axis.

    hidden_state:   (B, S, H) float
    attention_mask: (B, S)    float (0/1 mask)
    returns:        (B, H)
    """
    B, S, H = hidden_state.shape
    assert attention_mask.shape == (B, S)

    tb, ts, th = _pick_tiles(B, S, H, hidden_state.dtype)
    grid = (B // tb, H // th, S // ts)

    hidden_bytes = jnp.dtype(hidden_state.dtype).itemsize
    mask_bytes = jnp.dtype(attention_mask.dtype).itemsize
    cost = pl.CostEstimate(
        flops=2 * B * S * H,
        transcendentals=0,
        bytes_accessed=B * S * H * hidden_bytes + B * S * mask_bytes + B * H * hidden_bytes,
    )

    return pl.pallas_call(
        _mean_pool_kernel,
        out_shape=jax.ShapeDtypeStruct((B, H), hidden_state.dtype),
        grid_spec=pltpu.PrefetchScalarGridSpec(
            num_scalar_prefetch=0,
            grid=grid,
            in_specs=[
                pl.BlockSpec((tb, ts), lambda b, h, s: (b, s)),
                pl.BlockSpec((tb, ts, th), lambda b, h, s: (b, s, h)),
            ],
            out_specs=pl.BlockSpec((tb, th), lambda b, h, s: (b, h)),
            scratch_shapes=[
                pltpu.VMEM((tb, th), jnp.float32),   # running masked sum
                pltpu.VMEM((tb, 1), jnp.float32),    # running mask length
            ],
        ),
        compiler_params=pltpu.CompilerParams(
            dimension_semantics=("parallel", "parallel", "arbitrary"),
        ),
        cost_estimate=cost,
    )(attention_mask, hidden_state)


def _reference(hidden_state, attention_mask):
    masked = attention_mask[:, :, None] * hidden_state
    return masked.sum(axis=1) / (attention_mask.sum(axis=1, keepdims=True) + 1e-5)


if __name__ == "__main__":
    key = jax.random.PRNGKey(0)
    k_h, k_h2, k_len2 = jax.random.split(key, 3)

    # Small demo shape consistent with the module's forward: (B, S, H) + (B, S).
    B, S, H = 2, 8, 32
    hidden_state = jax.random.normal(k_h, (B, S, H), dtype=jnp.float32)
    lengths = jnp.array([5, 8], dtype=jnp.int32)
    attention_mask = (jnp.arange(S)[None, :] < lengths[:, None]).astype(jnp.float32)

    out = jax.block_until_ready(mean_pooling(hidden_state, attention_mask))
    ref = _reference(hidden_state, attention_mask)
    assert out.shape == (B, H)
    assert jnp.allclose(out, ref, atol=5e-3, rtol=5e-3), "small-shape mismatch"

    # A second shape that exercises the tiled grid and the S-axis accumulation
    # (tb=8, th=256, ts=512 -> grid (1, 1, 2)).
    B2, S2, H2 = 8, 1024, 256
    hidden2 = jax.random.normal(k_h2, (B2, S2, H2), dtype=jnp.float32)
    lens2 = jax.random.randint(k_len2, (B2,), minval=1, maxval=S2 + 1)
    mask2 = (jnp.arange(S2)[None, :] < lens2[:, None]).astype(jnp.float32)

    out2 = jax.block_until_ready(mean_pooling(hidden2, mask2))
    ref2 = _reference(hidden2, mask2)
    assert out2.shape == (B2, H2)
    assert jnp.allclose(out2, ref2, atol=5e-3, rtol=5e-3), "tiled-shape mismatch"

    print("KERNEL_OK")
</pallas_src>

<mosaic_0001>
module attributes {stable_mosaic.version = 11 : i64} {
  func.func @_mean_pool_kernel(%arg0: i32, %arg1: i32, %arg2: i32, %arg3: memref<2x8xf32, #tpu.memory_space<vmem>>, %arg4: memref<2x8x32xf32, #tpu.memory_space<vmem>>, %arg5: memref<2x32xf32, #tpu.memory_space<vmem>>, %arg6: memref<2x32xf32, #tpu.memory_space<vmem>>, %arg7: memref<2x1xf32, #tpu.memory_space<vmem>>) attributes {dimension_semantics = [#tpu.dimension_semantics<parallel>, #tpu.dimension_semantics<parallel>, #tpu.dimension_semantics<arbitrary>], iteration_bounds = array<i64: 1, 1, 1>, scalar_prefetch = 0 : i64, scratch_operands = 2 : i64, tpu.core_type = #tpu.core_type<tc>, window_params = [{transform_indices = @transform_0, window_bounds = array<i64: 2, 8>}, {transform_indices = @transform_1, window_bounds = array<i64: 2, 8, 32>}, {transform_indices = @transform_2, window_bounds = array<i64: 2, 32>}]} {
    %c0_i32 = arith.constant 0 : i32
    %0 = arith.cmpi eq, %arg2, %c0_i32 : i32
    %1 = arith.extui %0 : i1 to i32
    %c0_i32_0 = arith.constant 0 : i32
    %2 = arith.cmpi ne, %1, %c0_i32_0 : i32
    scf.if %2 {
      %cst_16 = arith.constant 0.000000e+00 : f32
      %20 = vector.broadcast %cst_16 : f32 to vector<2x32xf32>
      %c0_17 = arith.constant 0 : index
      %c0_18 = arith.constant 0 : index
      %21 = vector.load %arg6[%c0_17, %c0_18] : memref<2x32xf32, #tpu.memory_space<vmem>>, vector<2x32xf32>
      tpu.vector_store %arg6[%c0_17, %c0_18], %20 {strides = array<i32>} : memref<2x32xf32, #tpu.memory_space<vmem>>, vector<2x32xf32>,
      %cst_19 = arith.constant 0.000000e+00 : f32
      %22 = vector.broadcast %cst_19 : f32 to vector<2x1xf32>
      %c0_20 = arith.constant 0 : index
      %c0_21 = arith.constant 0 : index
      %23 = vector.load %arg7[%c0_20, %c0_21] : memref<2x1xf32, #tpu.memory_space<vmem>>, vector<2x1xf32>
      tpu.vector_store %arg7[%c0_20, %c0_21], %22 {strides = array<i32>} : memref<2x1xf32, #tpu.memory_space<vmem>>, vector<2x1xf32>,
    } else {
    }
    %c0 = arith.constant 0 : index
    %c0_1 = arith.constant 0 : index
    %c0_2 = arith.constant 0 : index
    %3 = vector.load %arg4[%c0, %c0_1, %c0_2] : memref<2x8x32xf32, #tpu.memory_space<vmem>>, vector<2x8x32xf32>
    %c0_3 = arith.constant 0 : index
    %c0_4 = arith.constant 0 : index
    %4 = vector.load %arg3[%c0_3, %c0_4] : memref<2x8xf32, #tpu.memory_space<vmem>>, vector<2x8xf32>
    %5 = vector.shape_cast %4 : vector<2x8xf32> to vector<2x8x1xf32>
    %6 = vector.broadcast %5 : vector<2x8x1xf32> to vector<2x8x32xf32>
    %7 = arith.mulf %6, %3 : vector<2x8x32xf32>
    %c0_5 = arith.constant 0 : index
    %c0_6 = arith.constant 0 : index
    %8 = vector.load %arg6[%c0_5, %c0_6] : memref<2x32xf32, #tpu.memory_space<vmem>>, vector<2x32xf32>
    %cst = arith.constant dense<0.000000e+00> : vector<2x32xf32>
    %9 = vector.multi_reduction <add>, %7, %cst [1] : vector<2x8x32xf32> to vector<2x32xf32>
    %10 = arith.addf %8, %9 : vector<2x32xf32>
    %c0_7 = arith.constant 0 : index
    %c0_8 = arith.constant 0 : index
    %11 = vector.load %arg6[%c0_7, %c0_8] : memref<2x32xf32, #tpu.memory_space<vmem>>, vector<2x32xf32>
    tpu.vector_store %arg6[%c0_7, %c0_8], %10 {strides = array<i32>} : memref<2x32xf32, #tpu.memory_space<vmem>>, vector<2x32xf32>,
    %c0_9 = arith.constant 0 : index
    %c0_10 = arith.constant 0 : index
    %12 = vector.load %arg7[%c0_9, %c0_10] : memref<2x1xf32, #tpu.memory_space<vmem>>, vector<2x1xf32>
    %cst_11 = arith.constant dense<0.000000e+00> : vector<2xf32>
    %13 = vector.multi_reduction <add>, %4, %cst_11 [1] : vector<2x8xf32> to vector<2xf32>
    %14 = vector.shape_cast %13 : vector<2xf32> to vector<2x1xf32>
    %15 = arith.addf %12, %14 : vector<2x1xf32>
    %c0_12 = arith.constant 0 : index
    %c0_13 = arith.constant 0 : index
    %16 = vector.load %arg7[%c0_12, %c0_13] : memref<2x1xf32, #tpu.memory_space<vmem>>, vector<2x1xf32>
    tpu.vector_store %arg7[%c0_12, %c0_13], %15 {strides = array<i32>} : memref<2x1xf32, #tpu.memory_space<vmem>>, vector<2x1xf32>,
    %c0_i32_14 = arith.constant 0 : i32
    %17 = arith.cmpi eq, %arg2, %c0_i32_14 : i32
    %18 = arith.extui %17 : i1 to i32
    %c0_i32_15 = arith.constant 0 : i32
    %19 = arith.cmpi ne, %18, %c0_i32_15 : i32
    scf.if %19 {
      %c0_16 = arith.constant 0 : index
      %c0_17 = arith.constant 0 : index
      %20 = vector.load %arg7[%c0_16, %c0_17] : memref<2x1xf32, #tpu.memory_space<vmem>>, vector<2x1xf32>
      %cst_18 = arith.constant 9.99999974E-6 : f32
      %21 = vector.broadcast %cst_18 : f32 to vector<2x1xf32>
      %22 = arith.addf %20, %21 : vector<2x1xf32>
      %23 = tpu.reciprocal %22 {approx = true} : vector<2x1xf32> -> vector<2x1xf32>
      %c0_19 = arith.constant 0 : index
      %c0_20 = arith.constant 0 : index
      %24 = vector.load %arg6[%c0_19, %c0_20] : memref<2x32xf32, #tpu.memory_space<vmem>>, vector<2x32xf32>
      %25 = vector.broadcast %23 : vector<2x1xf32> to vector<2x32xf32>
      %26 = arith.mulf %24, %25 : vector<2x32xf32>
      %c0_21 = arith.constant 0 : index
      %c0_22 = arith.constant 0 : index
      %27 = vector.load %arg5[%c0_21, %c0_22] : memref<2x32xf32, #tpu.memory_space<vmem>>, vector<2x32xf32>
      tpu.vector_store %arg5[%c0_21, %c0_22], %26 {strides = array<i32>} : memref<2x32xf32, #tpu.memory_space<vmem>>, vector<2x32xf32>,
    } else {
    }
    return
  }
  func.func @transform_0(%arg0: i32, %arg1: i32, %arg2: i32) -> (i32, i32) {
    %c0_i32 = arith.constant 0 : i32
    return %arg0, %arg2 : i32, i32
  }
  func.func @transform_1(%arg0: i32, %arg1: i32, %arg2: i32) -> (i32, i32, i32) {
    %c0_i32 = arith.constant 0 : i32
    return %arg0, %arg2, %arg1 : i32, i32, i32
  }
  func.func @transform_2(%arg0: i32, %arg1: i32, %arg2: i32) -> (i32, i32) {
    %c0_i32 = arith.constant 0 : i32
    return %arg0, %arg1 : i32, i32
  }
}

</mosaic_0001>

<llo_original>
// kernel: tpu_custom_call.1
$region0: #{tpu_custom_call.1}
  #allocation0 [shape = 'u32[]', space=smem, size = 0x4, offset = 0x4, fixed_abs, tag = 'smem constant byte address 0x4 - core index']
  #allocation1 [shape = 'u32[144,128]{1,0:T(1,128)}', space=vmem, size = 0x12000, scoped, tag = 'internal scratch']
  #allocation2 [shape = 'f32[2,32]{1,0:T(2,128)}', space=vmem, size = 0x400, scoped, tag = 'scratch operand']
  #allocation3 [shape = 'f32[2,1]{1,0:T(2,128)}', space=vmem, size = 0x400, scoped, tag = 'scratch operand']
  %s0 = inlined_call_operand.hbm [shape: f32[2,8], index: 0, kind: input, shape index: {}]
  %s1 = inlined_call_operand.hbm [shape: f32[2,8,32], index: 1, kind: input, shape index: {}]
  %s2 = inlined_call_operand.hbm [shape: f32[2,32], index: 2, kind: output, shape index: {}]
  %s3 = sld [smem:[#allocation0]]
  $region34: #{tpu_custom_call.1} parent=0
    _
  %s5 = ssub.s32 1, %s3
  %s6 = scalar_select 0, %s5, %s3
  $region1: #{tpu_custom_call.1} parent=0
    #allocation4 [shape = 'u8[1024]{0}', space=vmem, size = 0x400, scoped, tag = 'input window, operand 0, single buffered']
    #allocation5 [shape = 's32[1]{0}', space=sflag, size = 0x4, scoped, tag = 'scoped memory for tpu_custom_call.1']
    #allocation6 [shape = 's32[1]{0}', space=sflag, size = 0x4, scoped, tag = 'scoped memory for tpu_custom_call.1']
    #allocation7 [shape = 'u8[8192]{0}', space=vmem, size = 0x2000, scoped, tag = 'input window, operand 1, single buffered']
    #allocation8 [shape = 's32[1]{0}', space=sflag, size = 0x4, scoped, tag = 'scoped memory for tpu_custom_call.1']
    #allocation9 [shape = 'u8[1024]{0}', space=vmem, size = 0x400, scoped, tag = 'output window, operand 0, single buffered']
    %7 = vsyncpa [#allocation5], 0
    %8 = vsyncpa [#allocation8], 0
    %9 = vsyncpa [#allocation6], 0
    // Predicated region
    $region2: #{tpu_custom_call.1} parent=1 // pred_check
      _
    $region3: #{tpu_custom_call.1} parent=1 // pred_check_branch
      %11 = sbr.rel (0) target = $region5
    $region4: #{tpu_custom_call.1} parent=1 // pred_region
      %s13 = ssub.s32 32, 32
      %14 = vsyncadd [#allocation5], %s13
      %s16 = sshll.u32 [#allocation4], 4
      %s17 = int_to_ptr.vmem [resolvable:$true] %s16
      %19 = dma.hbm_to_vmem [thread:$0]  %s0, 32, %s17, [#allocation5]
    $region5: #{tpu_custom_call.1} parent=1 // pred_fallthru
      _
    // Predicated region
    $region6: #{tpu_custom_call.1} parent=1 // pred_check
      _
    $region7: #{tpu_custom_call.1} parent=1 // pred_check_branch
      %21 = sbr.rel (0) target = $region9
    $region8: #{tpu_custom_call.1} parent=1 // pred_region
      %s23 = ssub.s32 256, 256
      %24 = vsyncadd [#allocation8], %s23
      %s25 = sshll.u32 [#allocation7], 4
      %s26 = int_to_ptr.vmem [resolvable:$true] %s25
      %31 = dma.hbm_to_vmem [thread:$0]  %s1, 256, %s26, [#allocation8], 128, 128, 8
    $region9: #{tpu_custom_call.1} parent=1 // pred_fallthru
      _
    // Predicated region
    $region10: #{tpu_custom_call.1} parent=1 // pred_check
      _
    $region11: #{tpu_custom_call.1} parent=1 // pred_check_branch
      %33 = sbr.rel (0) target = $region13
    $region12: #{tpu_custom_call.1} parent=1 // pred_region
      %34 = dma.done [#allocation5], 32
    $region13: #{tpu_custom_call.1} parent=1 // pred_fallthru
      _
    // Predicated region
    $region14: #{tpu_custom_call.1} parent=1 // pred_check
      _
    $region15: #{tpu_custom_call.1} parent=1 // pred_check_branch
      %36 = sbr.rel (0) target = $region17
    $region16: #{tpu_custom_call.1} parent=1 // pred_region
      %37 = dma.done [#allocation8], 256
    $region17: #{tpu_custom_call.1} parent=1 // pred_fallthru
      _
    %p38 = scmp.eq.s32.totalorder 0, 0
    // Predicated region
    $region18: #{tpu_custom_call.1} parent=1 // pred_check
      %p39 = pneg %p38
    $region19: #{tpu_custom_call.1} parent=1 // pred_check_branch
      %41 = sbr.rel (%p39) target = $region21
    $region20: #{tpu_custom_call.1} parent=1 // pred_region
      %vm42 = vcmask 254976
      %43 = vst.msk [vmem:[#allocation2] sm:$0x3] %vm42, 0.0
      %vm44 = vcmask 1024
      %45 = vst.msk [vmem:[#allocation3] sm:$0x3] %vm44, 0.0
    $region21: #{tpu_custom_call.1} parent=1 // pred_fallthru
      _
    %v46 = vld [vmem:[#allocation7] sm:$0xff]
    %v47 = vld [vmem:[#allocation7 + $0x8] sm:$0xff]
    %v48 = vld [vmem:[#allocation4] sm:$0x3]
    %v49 = vlaneseq
    %v50 = vshrl.u32 %v49, 7
    %v51 = vsub.s32 0, %v50
    %v52 = vrot.slane %v48, %v51
    %54 = vbcast.lane.b32.xlu0 %v52, 256
    %v55 = vpop.permute.xlu0 %54
    %v56 = vlaneseq
    %v57 = vshrl.u32 %v56, 7
    %v58 = vsub.s32 1, %v57
    %v59 = vrot.slane %v48, %v58
    %61 = vbcast.lane.b32.xlu0 %v59, 256
    %v62 = vpop.permute.xlu0 %61
    %v63 = vmul.f32 %v55, %v46
    %v64 = vmul.f32 %v62, %v47
    %v65 = vld [vmem:[#allocation2] sm:$0x3]
    %vm66 = vcmask 261120
    %v67 = vsel %vm66, %v63, 0.0
    %v68 = vrot.slane %v67, 4
    %v69 = vadd.f32 %v67, %v68
    %v70 = vrot.slane %v69, 2
    %v71 = vadd.f32 %v69, %v70
    %v72 = vrot.slane %v71, 1
    %v73 = vadd.f32 %v71, %v72
    %v74 = vsel %vm66, %v64, 0.0
    %v75 = vrot.slane %v74, 4
    %v76 = vadd.f32 %v74, %v75
    %v77 = vrot.slane %v76, 2
    %v78 = vadd.f32 %v76, %v77
    %v79 = vrot.slane %v78, 1
    %v80 = vadd.f32 %v78, %v79
    %vm83 = vcmask 1041409
    %v84 = vsel %vm83, %v80, %v73
    %v86 = vadd.f32 %v65, %v84
    %vm87 = vcmask 254976
    %88 = vst.msk [vmem:[#allocation2] sm:$0x3] %vm87, %v86
    %v89 = vld [vmem:[#allocation3] sm:$0x3]
    %vm90 = vcmask 58368
    %v91 = vsel %vm90, %v48, 0.0
    %92 = vadd.xlane.f32.xlu0 %v91
    %v93 = vpop.xlane.xlu0 %92
    %v94 = vadd.f32 %v89, %v93
    %vm95 = vcmask 1024
    %96 = vst.msk [vmem:[#allocation3] sm:$0x3] %vm95, %v94
    // Predicated region
    $region22: #{tpu_custom_call.1} parent=1 // pred_check
      %p97 = pneg %p38
    $region23: #{tpu_custom_call.1} parent=1 // pred_check_branch
      %99 = sbr.rel (%p97) target = $region25
    $region24: #{tpu_custom_call.1} parent=1 // pred_region
      %v100 = vld [vmem:[#allocation3] sm:$0x3]
      %v101 = vadd.f32 %v100, 1e-05
      %v102 = vrcp.pop %v101
      %v103 = vld [vmem:[#allocation2] sm:$0x3]
      %105 = vset.pattern.permute.xlu0 0
      %106 = vperm.xlu0 %105, %v102
      %v107 = vpop.permute.xlu0 %106
      %v109 = vmul.f32 %v103, %v107
      %110 = vst.msk [vmem:[#allocation9] sm:$0x3] %vm87, %v109
    $region25: #{tpu_custom_call.1} parent=1 // pred_fallthru
      _
    // Predicated region
    $region26: #{tpu_custom_call.1} parent=1 // pred_check
      _
    $region27: #{tpu_custom_call.1} parent=1 // pred_check_branch
      %112 = sbr.rel (0) target = $region29
    $region28: #{tpu_custom_call.1} parent=1 // pred_region
      %s114 = ssub.s32 32, 32
      %115 = vsyncadd [#allocation6], %s114
      %s117 = sshll.u32 [#allocation9], 4
      %s118 = int_to_ptr.vmem [resolvable:$true] %s117
      %120 = dma.vmem_to_hbm [thread:$0]  %s118, 32, %s2, [#allocation6]
    $region29: #{tpu_custom_call.1} parent=1 // pred_fallthru
      _
    // Predicated region
    $region30: #{tpu_custom_call.1} parent=1 // pred_check
      _
    $region31: #{tpu_custom_call.1} parent=1 // pred_check_branch
      %122 = sbr.rel (0) target = $region33
    $region32: #{tpu_custom_call.1} parent=1 // pred_region
      %123 = dma.done [#allocation6], 32
    $region33: #{tpu_custom_call.1} parent=1 // pred_fallthru
      _
    %124 = vsyncpa [#allocation5], 1
    %125 = vsyncpa [#allocation8], 1
    %126 = vsyncpa [#allocation6], 1

</llo_original>
